<compile_context>
chip_gen: v5e
topology: v5e:2x2
jax: 0.10.0
libtpu: 0.0.40
codegen_flags: <defaults>
</compile_context>

<pallas_src>
import functools
import math

import jax
import jax.numpy as jnp
from jax.experimental import pallas as pl
from jax.experimental.pallas import tpu as pltpu

_INV_SQRT2 = 1.0 / math.sqrt(2.0)
_TANH_GELU_C = math.sqrt(2.0 / math.pi)


def _gelu(v, approximate):
    if approximate:
        # tanh-form GELU: tanh lowers to the EUP (its own VLIW slot), freeing
        # the VALU.  ~1e-3 relative deviation from nn.GELU(approximate='none').
        return 0.5 * v * (1.0 + jnp.tanh(_TANH_GELU_C * (v + 0.044715 * v * v * v)))
    # Exact erf-based GELU == nn.GELU() default.
    return 0.5 * v * (1.0 + jax.lax.erf(v * _INV_SQRT2))


# ----------------------------------------------------------------------------
# Pallas kernel: the whole MLP hot path (4 matmuls + 3 GELUs) fused.
# One grid step processes one batch tile; weights/biases are VMEM-resident.
# ----------------------------------------------------------------------------
def _actor_kernel(x_ref,
                  wfe_ref, bfe_ref,
                  w1_ref, b1_ref,
                  w2_ref, b2_ref,
                  w3_ref, b3_ref,
                  out_ref,
                  *, approximate_gelu):
    x = x_ref[...].astype(jnp.float32)

    # feature_extract (Linear) + GELU
    h = jnp.dot(x, wfe_ref[...], preferred_element_type=jnp.float32)
    h = _gelu(h + bfe_ref[...].astype(jnp.float32), approximate_gelu)

    # fc1 + GELU
    h = jnp.dot(h, w1_ref[...], preferred_element_type=jnp.float32)
    h = _gelu(h + b1_ref[...].astype(jnp.float32), approximate_gelu)

    # fc2 + GELU
    h = jnp.dot(h, w2_ref[...], preferred_element_type=jnp.float32)
    h = _gelu(h + b2_ref[...].astype(jnp.float32), approximate_gelu)

    # fc3 (logits)
    h = jnp.dot(h, w3_ref[...], preferred_element_type=jnp.float32)
    out_ref[...] = (h + b3_ref[...].astype(jnp.float32)).astype(out_ref.dtype)


# ----------------------------------------------------------------------------
# Wrapper.  Params must already be stored as W:(in, out), b:(1, out)
# (see init_actor_params) — no per-call transposes/reshapes.
# ----------------------------------------------------------------------------
def actor_forward(state, params, *, batch_tile=512, approximate_gelu=False):
    B, state_dim = state.shape
    feat = params["wfe"].shape[1]
    hidden2 = params["w2"].shape[1]
    action_size = params["w3"].shape[1]

    # Batch tiling: small batches -> single full-array block; large batches ->
    # 512-row tiles (8-aligned), padded up to a tile multiple if needed.
    tb = B if B <= batch_tile else batch_tile
    pad = (-B) % tb
    x = jnp.pad(state, ((0, pad), (0, 0))) if pad else state
    Bp = B + pad
    grid = (Bp // tb,)

    def act_spec(last_dim):   # batch-tiled activations / output
        return pl.BlockSpec((tb, last_dim), lambda i: (i, 0))

    def w_spec(shape):        # weights/biases resident across batch tiles
        return pl.BlockSpec(shape, lambda i: (0, 0))

    in_specs = [
        act_spec(state_dim),
        w_spec((state_dim, feat)),    w_spec((1, feat)),
        w_spec((feat, feat)),         w_spec((1, feat)),
        w_spec((feat, hidden2)),      w_spec((1, hidden2)),
        w_spec((hidden2, action_size)), w_spec((1, action_size)),
    ]
    out_spec = act_spec(action_size)

    # Advisory cost hint for XLA's scheduler around this tiny custom call.
    flops = 2 * Bp * (state_dim * feat + feat * feat
                      + feat * hidden2 + hidden2 * action_size)
    transcendentals = Bp * (feat + feat + hidden2)  # one erf/tanh per GELU elem
    param_bytes = sum(int(p.size) * p.dtype.itemsize for p in params.values())
    bytes_accessed = (int(x.size) * x.dtype.itemsize
                      + Bp * action_size * 4 + param_bytes)

    kernel = functools.partial(_actor_kernel, approximate_gelu=approximate_gelu)
    out = pl.pallas_call(
        kernel,
        out_shape=jax.ShapeDtypeStruct((Bp, action_size), jnp.float32),
        grid=grid,
        in_specs=in_specs,
        out_specs=out_spec,
        compiler_params=pltpu.CompilerParams(
            dimension_semantics=("parallel",),   # megacore sharding on v7x
        ),
        cost_estimate=pl.CostEstimate(
            flops=flops,
            transcendentals=transcendentals,
            bytes_accessed=bytes_accessed,
        ),
    )(x,
      params["wfe"], params["bfe"],
      params["w1"], params["b1"],
      params["w2"], params["b2"],
      params["w3"], params["b3"])

    return out[:B] if pad else out


# ----------------------------------------------------------------------------
# Deterministic parameter init (mimics torch.nn.Linear's U(-1/sqrt(fan_in), ..)).
# Weights are created directly in (in, out) layout, biases as (1, out), so the
# hot path never transposes.  dtype=jnp.bfloat16 halves HBM traffic on
# v6e/v7x for non-toy feature sizes (kernel math stays f32).
# ----------------------------------------------------------------------------
def init_actor_params(key, state_dim, feature_size, action_size,
                      dtype=jnp.float32):
    hidden2 = feature_size // action_size

    def linear_init(k, in_f, out_f):
        kw, kb = jax.random.split(k)
        bound = 1.0 / math.sqrt(in_f)
        w = jax.random.uniform(kw, (in_f, out_f), jnp.float32, -bound, bound)
        b = jax.random.uniform(kb, (1, out_f), jnp.float32, -bound, bound)
        return w.astype(dtype), b.astype(dtype)

    k_fe, k1, k2, k3 = jax.random.split(key, 4)
    wfe, bfe = linear_init(k_fe, state_dim, feature_size)
    w1, b1 = linear_init(k1, feature_size, feature_size)
    w2, b2 = linear_init(k2, feature_size, hidden2)
    w3, b3 = linear_init(k3, hidden2, action_size)
    return {"wfe": wfe, "bfe": bfe,
            "w1": w1, "b1": b1,
            "w2": w2, "b2": b2,
            "w3": w3, "b3": b3}


# Pure-JAX reference (exact erf GELU) for correctness validation.
def actor_reference(state, params):
    def gelu(v):
        return 0.5 * v * (1.0 + jax.lax.erf(v * _INV_SQRT2))
    h = gelu(state @ params["wfe"] + params["bfe"])
    h = gelu(h @ params["w1"] + params["b1"])
    h = gelu(h @ params["w2"] + params["b2"])
    return h @ params["w3"] + params["b3"]


if __name__ == "__main__":
    # Small shapes consistent with the module's forward:
    batch = 8
    state_dim = 32
    feature_size = 32
    action_size = 4            # fc2 output = feature_size // action_size = 8

    root = jax.random.PRNGKey(0)
    k_state, k_params = jax.random.split(root)

    state = jax.random.normal(k_state, (batch, state_dim), jnp.float32)
    params = init_actor_params(k_params, state_dim, feature_size, action_size)

    logits = actor_forward(state, params)          # exact-GELU default
    jax.block_until_ready(logits)

    assert logits.shape == (batch, action_size)
    assert bool(jnp.all(jnp.isfinite(logits)))

    ref = actor_reference(state, params)
    assert bool(jnp.allclose(logits, ref, rtol=1e-5, atol=1e-5))

    print("KERNEL_OK")
</pallas_src>

<mosaic_0001>
module attributes {stable_mosaic.version = 11 : i64} {
  func.func @_actor_kernel(%arg0: i32, %arg1: memref<8x32xf32, #tpu.memory_space<vmem>>, %arg2: memref<32x32xf32, #tpu.memory_space<vmem>>, %arg3: memref<1x32xf32, #tpu.memory_space<vmem>>, %arg4: memref<32x32xf32, #tpu.memory_space<vmem>>, %arg5: memref<1x32xf32, #tpu.memory_space<vmem>>, %arg6: memref<32x8xf32, #tpu.memory_space<vmem>>, %arg7: memref<1x8xf32, #tpu.memory_space<vmem>>, %arg8: memref<8x4xf32, #tpu.memory_space<vmem>>, %arg9: memref<1x4xf32, #tpu.memory_space<vmem>>, %arg10: memref<8x4xf32, #tpu.memory_space<vmem>>) attributes {dimension_semantics = [#tpu.dimension_semantics<parallel>], iteration_bounds = array<i64: 1>, scalar_prefetch = 0 : i64, scratch_operands = 0 : i64, tpu.core_type = #tpu.core_type<tc>, window_params = [{transform_indices = @transform_0, window_bounds = array<i64: 8, 32>}, {pipeline_mode = #tpu.pipeline_mode<synchronous>, transform_indices = @transform_1, window_bounds = array<i64: 32, 32>}, {pipeline_mode = #tpu.pipeline_mode<synchronous>, transform_indices = @transform_2, window_bounds = array<i64: 1, 32>}, {pipeline_mode = #tpu.pipeline_mode<synchronous>, transform_indices = @transform_3, window_bounds = array<i64: 32, 32>}, {pipeline_mode = #tpu.pipeline_mode<synchronous>, transform_indices = @transform_4, window_bounds = array<i64: 1, 32>}, {pipeline_mode = #tpu.pipeline_mode<synchronous>, transform_indices = @transform_5, window_bounds = array<i64: 32, 8>}, {pipeline_mode = #tpu.pipeline_mode<synchronous>, transform_indices = @transform_6, window_bounds = array<i64: 1, 8>}, {pipeline_mode = #tpu.pipeline_mode<synchronous>, transform_indices = @transform_7, window_bounds = array<i64: 8, 4>}, {pipeline_mode = #tpu.pipeline_mode<synchronous>, transform_indices = @transform_8, window_bounds = array<i64: 1, 4>}, {transform_indices = @transform_9, window_bounds = array<i64: 8, 4>}]} {
    %c0 = arith.constant 0 : index
    %c0_0 = arith.constant 0 : index
    %0 = vector.load %arg1[%c0, %c0_0] : memref<8x32xf32, #tpu.memory_space<vmem>>, vector<8x32xf32>
    %c0_1 = arith.constant 0 : index
    %c0_2 = arith.constant 0 : index
    %1 = vector.load %arg2[%c0_1, %c0_2] : memref<32x32xf32, #tpu.memory_space<vmem>>, vector<32x32xf32>
    %cst = arith.constant dense<0.000000e+00> : vector<8x32xf32>
    %2 = tpu.matmul %0, %1, %cst {dimension_numbers = #tpu.dot_dimension_numbers<[1], [0], [0], [1], [0, 0, 1, 1], [], []>} : vector<8x32xf32>, vector<32x32xf32>, vector<8x32xf32> -> vector<8x32xf32>
    %c0_3 = arith.constant 0 : index
    %c0_4 = arith.constant 0 : index
    %3 = vector.load %arg3[%c0_3, %c0_4] : memref<1x32xf32, #tpu.memory_space<vmem>>, vector<1x32xf32>
    %4 = vector.broadcast %3 : vector<1x32xf32> to vector<8x32xf32>
    %5 = arith.addf %2, %4 : vector<8x32xf32>
    %cst_5 = arith.constant 5.000000e-01 : f32
    %6 = vector.broadcast %cst_5 : f32 to vector<8x32xf32>
    %7 = arith.mulf %6, %5 : vector<8x32xf32>
    %cst_6 = arith.constant 0.707106769 : f32
    %8 = vector.broadcast %cst_6 : f32 to vector<8x32xf32>
    %9 = arith.mulf %5, %8 : vector<8x32xf32>
    %10 = math.erf %9 : vector<8x32xf32>
    %cst_7 = arith.constant 1.000000e+00 : f32
    %11 = vector.broadcast %cst_7 : f32 to vector<8x32xf32>
    %12 = arith.addf %11, %10 : vector<8x32xf32>
    %13 = arith.mulf %7, %12 : vector<8x32xf32>
    %c0_8 = arith.constant 0 : index
    %c0_9 = arith.constant 0 : index
    %14 = vector.load %arg4[%c0_8, %c0_9] : memref<32x32xf32, #tpu.memory_space<vmem>>, vector<32x32xf32>
    %cst_10 = arith.constant dense<0.000000e+00> : vector<8x32xf32>
    %15 = tpu.matmul %13, %14, %cst_10 {dimension_numbers = #tpu.dot_dimension_numbers<[1], [0], [0], [1], [0, 0, 1, 1], [], []>} : vector<8x32xf32>, vector<32x32xf32>, vector<8x32xf32> -> vector<8x32xf32>
    %c0_11 = arith.constant 0 : index
    %c0_12 = arith.constant 0 : index
    %16 = vector.load %arg5[%c0_11, %c0_12] : memref<1x32xf32, #tpu.memory_space<vmem>>, vector<1x32xf32>
    %17 = vector.broadcast %16 : vector<1x32xf32> to vector<8x32xf32>
    %18 = arith.addf %15, %17 : vector<8x32xf32>
    %cst_13 = arith.constant 5.000000e-01 : f32
    %19 = vector.broadcast %cst_13 : f32 to vector<8x32xf32>
    %20 = arith.mulf %19, %18 : vector<8x32xf32>
    %cst_14 = arith.constant 0.707106769 : f32
    %21 = vector.broadcast %cst_14 : f32 to vector<8x32xf32>
    %22 = arith.mulf %18, %21 : vector<8x32xf32>
    %23 = math.erf %22 : vector<8x32xf32>
    %cst_15 = arith.constant 1.000000e+00 : f32
    %24 = vector.broadcast %cst_15 : f32 to vector<8x32xf32>
    %25 = arith.addf %24, %23 : vector<8x32xf32>
    %26 = arith.mulf %20, %25 : vector<8x32xf32>
    %c0_16 = arith.constant 0 : index
    %c0_17 = arith.constant 0 : index
    %27 = vector.load %arg6[%c0_16, %c0_17] : memref<32x8xf32, #tpu.memory_space<vmem>>, vector<32x8xf32>
    %cst_18 = arith.constant dense<0.000000e+00> : vector<8x8xf32>
    %28 = tpu.matmul %26, %27, %cst_18 {dimension_numbers = #tpu.dot_dimension_numbers<[1], [0], [0], [1], [0, 0, 1, 1], [], []>} : vector<8x32xf32>, vector<32x8xf32>, vector<8x8xf32> -> vector<8x8xf32>
    %c0_19 = arith.constant 0 : index
    %c0_20 = arith.constant 0 : index
    %29 = vector.load %arg7[%c0_19, %c0_20] : memref<1x8xf32, #tpu.memory_space<vmem>>, vector<1x8xf32>
    %30 = vector.broadcast %29 : vector<1x8xf32> to vector<8x8xf32>
    %31 = arith.addf %28, %30 : vector<8x8xf32>
    %cst_21 = arith.constant 5.000000e-01 : f32
    %32 = vector.broadcast %cst_21 : f32 to vector<8x8xf32>
    %33 = arith.mulf %32, %31 : vector<8x8xf32>
    %cst_22 = arith.constant 0.707106769 : f32
    %34 = vector.broadcast %cst_22 : f32 to vector<8x8xf32>
    %35 = arith.mulf %31, %34 : vector<8x8xf32>
    %36 = math.erf %35 : vector<8x8xf32>
    %cst_23 = arith.constant 1.000000e+00 : f32
    %37 = vector.broadcast %cst_23 : f32 to vector<8x8xf32>
    %38 = arith.addf %37, %36 : vector<8x8xf32>
    %39 = arith.mulf %33, %38 : vector<8x8xf32>
    %c0_24 = arith.constant 0 : index
    %c0_25 = arith.constant 0 : index
    %40 = vector.load %arg8[%c0_24, %c0_25] : memref<8x4xf32, #tpu.memory_space<vmem>>, vector<8x4xf32>
    %cst_26 = arith.constant dense<0.000000e+00> : vector<8x4xf32>
    %41 = tpu.matmul %39, %40, %cst_26 {dimension_numbers = #tpu.dot_dimension_numbers<[1], [0], [0], [1], [0, 0, 1, 1], [], []>} : vector<8x8xf32>, vector<8x4xf32>, vector<8x4xf32> -> vector<8x4xf32>
    %c0_27 = arith.constant 0 : index
    %c0_28 = arith.constant 0 : index
    %42 = vector.load %arg9[%c0_27, %c0_28] : memref<1x4xf32, #tpu.memory_space<vmem>>, vector<1x4xf32>
    %43 = vector.broadcast %42 : vector<1x4xf32> to vector<8x4xf32>
    %44 = arith.addf %41, %43 : vector<8x4xf32>
    %c0_29 = arith.constant 0 : index
    %c0_30 = arith.constant 0 : index
    %45 = vector.load %arg10[%c0_29, %c0_30] : memref<8x4xf32, #tpu.memory_space<vmem>>, vector<8x4xf32>
    tpu.vector_store %arg10[%c0_29, %c0_30], %44 {strides = array<i32>} : memref<8x4xf32, #tpu.memory_space<vmem>>, vector<8x4xf32>,
    return
  }
  func.func @transform_0(%arg0: i32) -> (i32, i32) {
    %c0_i32 = arith.constant 0 : i32
    %c0_i32_0 = arith.constant 0 : i32
    return %arg0, %c0_i32 : i32, i32
  }
  func.func @transform_1(%arg0: i32) -> (i32, i32) {
    %c0_i32 = arith.constant 0 : i32
    %c0_i32_0 = arith.constant 0 : i32
    %c0_i32_1 = arith.constant 0 : i32
    return %c0_i32, %c0_i32_0 : i32, i32
  }
  func.func @transform_2(%arg0: i32) -> (i32, i32) {
    %c0_i32 = arith.constant 0 : i32
    %c0_i32_0 = arith.constant 0 : i32
    %c0_i32_1 = arith.constant 0 : i32
    return %c0_i32, %c0_i32_0 : i32, i32
  }
  func.func @transform_3(%arg0: i32) -> (i32, i32) {
    %c0_i32 = arith.constant 0 : i32
    %c0_i32_0 = arith.constant 0 : i32
    %c0_i32_1 = arith.constant 0 : i32
    return %c0_i32, %c0_i32_0 : i32, i32
  }
  func.func @transform_4(%arg0: i32) -> (i32, i32) {
    %c0_i32 = arith.constant 0 : i32
    %c0_i32_0 = arith.constant 0 : i32
    %c0_i32_1 = arith.constant 0 : i32
    return %c0_i32, %c0_i32_0 : i32, i32
  }
  func.func @transform_5(%arg0: i32) -> (i32, i32) {
    %c0_i32 = arith.constant 0 : i32
    %c0_i32_0 = arith.constant 0 : i32
    %c0_i32_1 = arith.constant 0 : i32
    return %c0_i32, %c0_i32_0 : i32, i32
  }
  func.func @transform_6(%arg0: i32) -> (i32, i32) {
    %c0_i32 = arith.constant 0 : i32
    %c0_i32_0 = arith.constant 0 : i32
    %c0_i32_1 = arith.constant 0 : i32
    return %c0_i32, %c0_i32_0 : i32, i32
  }
  func.func @transform_7(%arg0: i32) -> (i32, i32) {
    %c0_i32 = arith.constant 0 : i32
    %c0_i32_0 = arith.constant 0 : i32
    %c0_i32_1 = arith.constant 0 : i32
    return %c0_i32, %c0_i32_0 : i32, i32
  }
  func.func @transform_8(%arg0: i32) -> (i32, i32) {
    %c0_i32 = arith.constant 0 : i32
    %c0_i32_0 = arith.constant 0 : i32
    %c0_i32_1 = arith.constant 0 : i32
    return %c0_i32, %c0_i32_0 : i32, i32
  }
  func.func @transform_9(%arg0: i32) -> (i32, i32) {
    %c0_i32 = arith.constant 0 : i32
    %c0_i32_0 = arith.constant 0 : i32
    return %arg0, %c0_i32 : i32, i32
  }
}

</mosaic_0001>

<llo_original>
// kernel: tpu_custom_call.1
$region0: #{tpu_custom_call.1}
  #allocation0 [shape = 'u32[]', space=smem, size = 0x4, offset = 0x4, fixed_abs, tag = 'smem constant byte address 0x4 - core index']
  #allocation1 [shape = 'u32[72,128]{1,0:T(1,128)}', space=vmem, size = 0x9000, scoped, tag = 'internal scratch']
  %s0 = inlined_call_operand.vmem [shape: f32[8,32], index: 0, kind: input, shape index: {}]
  %s1 = inlined_call_operand.vmem [shape: f32[32,32], index: 1, kind: input, shape index: {}]
  %s2 = inlined_call_operand.vmem [shape: f32[1,32], index: 2, kind: input, shape index: {}]
  %s3 = inlined_call_operand.hbm [shape: f32[32,32], index: 3, kind: input, shape index: {}]
  %s4 = inlined_call_operand.vmem [shape: f32[1,32], index: 4, kind: input, shape index: {}]
  %s5 = inlined_call_operand.vmem [shape: f32[32,8], index: 5, kind: input, shape index: {}]
  %s6 = inlined_call_operand.vmem [shape: f32[1,8], index: 6, kind: input, shape index: {}]
  %s7 = inlined_call_operand.vmem [shape: f32[8,4], index: 7, kind: input, shape index: {}]
  %s8 = inlined_call_operand.vmem [shape: f32[1,4], index: 8, kind: input, shape index: {}]
  %s9 = inlined_call_operand.vmem [shape: f32[8,4], index: 9, kind: output, shape index: {}]
  %s10 = sld [smem:[#allocation0]]
  $region50: #{tpu_custom_call.1} parent=0
    _
  %s12 = ssub.s32 1, %s10
  %s13 = scalar_select 0, %s12, %s10
  $region1: #{tpu_custom_call.1} parent=0
    #allocation2 [shape = 'u8[16384]{0}', space=vmem, size = 0x4000, scoped, tag = 'input window, operand 3, single buffered']
    #allocation3 [shape = 's32[1]{0}', space=sflag, size = 0x4, scoped, tag = 'scoped memory for tpu_custom_call.1']
    %14 = vsyncpa [#allocation3], 0
    // Predicated region
    $region2: #{tpu_custom_call.1} parent=1 // pred_check
      _
    $region3: #{tpu_custom_call.1} parent=1 // pred_check_branch
      %16 = sbr.rel (0) target = $region5
    $region4: #{tpu_custom_call.1} parent=1 // pred_region
      _
    $region5: #{tpu_custom_call.1} parent=1 // pred_fallthru
      _
    // Predicated region
    $region6: #{tpu_custom_call.1} parent=1 // pred_check
      _
    $region7: #{tpu_custom_call.1} parent=1 // pred_check_branch
      %18 = sbr.rel (0) target = $region9
    $region8: #{tpu_custom_call.1} parent=1 // pred_region
      _
    $region9: #{tpu_custom_call.1} parent=1 // pred_fallthru
      _
    // Predicated region
    $region10: #{tpu_custom_call.1} parent=1 // pred_check
      _
    $region11: #{tpu_custom_call.1} parent=1 // pred_check_branch
      %20 = sbr.rel (0) target = $region13
    $region12: #{tpu_custom_call.1} parent=1 // pred_region
      _
    $region13: #{tpu_custom_call.1} parent=1 // pred_fallthru
      _
    // Predicated region
    $region14: #{tpu_custom_call.1} parent=1 // pred_check
      _
    $region15: #{tpu_custom_call.1} parent=1 // pred_check_branch
      %22 = sbr.rel (0) target = $region17
    $region16: #{tpu_custom_call.1} parent=1 // pred_region
      %24 = vsyncadd [#allocation3], 0
      %s25 = sshll.u32 %s3, 4
      %s26 = int_to_ptr.hbm [resolvable:$true] %s25
      %s27 = sshll.u32 [#allocation2], 4
      %s28 = int_to_ptr.vmem [resolvable:$true] %s27
      %33 = dma.hbm_to_vmem [thread:$0]  %s26, 512, %s28, [#allocation3], 128, 128, 8
    $region17: #{tpu_custom_call.1} parent=1 // pred_fallthru
      _
    // Predicated region
    $region18: #{tpu_custom_call.1} parent=1 // pred_check
      _
    $region19: #{tpu_custom_call.1} parent=1 // pred_check_branch
      %35 = sbr.rel (0) target = $region21
    $region20: #{tpu_custom_call.1} parent=1 // pred_region
      _
    $region21: #{tpu_custom_call.1} parent=1 // pred_fallthru
      _
    // Predicated region
    $region22: #{tpu_custom_call.1} parent=1 // pred_check
      _
    $region23: #{tpu_custom_call.1} parent=1 // pred_check_branch
      %37 = sbr.rel (0) target = $region25
    $region24: #{tpu_custom_call.1} parent=1 // pred_region
      _
    $region25: #{tpu_custom_call.1} parent=1 // pred_fallthru
      _
    // Predicated region
    $region26: #{tpu_custom_call.1} parent=1 // pred_check
      _
    $region27: #{tpu_custom_call.1} parent=1 // pred_check_branch
      %39 = sbr.rel (0) target = $region29
    $region28: #{tpu_custom_call.1} parent=1 // pred_region
      _
    $region29: #{tpu_custom_call.1} parent=1 // pred_fallthru
      _
    // Predicated region
    $region30: #{tpu_custom_call.1} parent=1 // pred_check
      _
    $region31: #{tpu_custom_call.1} parent=1 // pred_check_branch
      %41 = sbr.rel (0) target = $region33
    $region32: #{tpu_custom_call.1} parent=1 // pred_region
      _
    $region33: #{tpu_custom_call.1} parent=1 // pred_fallthru
      _
    // Predicated region
    $region34: #{tpu_custom_call.1} parent=1 // pred_check
      _
    $region35: #{tpu_custom_call.1} parent=1 // pred_check_branch
      %43 = sbr.rel (0) target = $region37
    $region36: #{tpu_custom_call.1} parent=1 // pred_region
      _
    $region37: #{tpu_custom_call.1} parent=1 // pred_fallthru
      _
    // Predicated region
    $region38: #{tpu_custom_call.1} parent=1 // pred_check
      _
    $region39: #{tpu_custom_call.1} parent=1 // pred_check_branch
      %45 = sbr.rel (0) target = $region41
    $region40: #{tpu_custom_call.1} parent=1 // pred_region
      %47 = dma.done [#allocation3], 512
    $region41: #{tpu_custom_call.1} parent=1 // pred_fallthru
      _
    %v48 = vld [vmem:[%s0] sm:$0xff]
    %v49 = vld [vmem:[%s1] sm:$0xff]
    %v50 = vld [vmem:[%s1 + $0x8] sm:$0xff]
    %v51 = vld [vmem:[%s1 + $0x10] sm:$0xff]
    %v52 = vld [vmem:[%s1 + $0x18] sm:$0xff]
    %v53 = vld [vmem:[%s2] sm:$0x1]
    %v55 = vperm.slane %v53, 0
    %vm57 = vcmask 261120
    %v59 = vsel %vm57, %v48, 0
    %61 = vmatpush.msra.mxu0 0.0
    %62 = vmatpush.msra.mxu0 0.0
    %63 = vmatpush.msra.mxu0 0.0
    %64 = vmatpush.msra.mxu0 0.0
    %65 = vmatpush.msra.mxu0 0.0
    %66 = vmatpush.msra.mxu0 0.0
    %67 = vmatpush.msra.mxu0 0.0
    %68 = vmatpush.msra.mxu0 0.0
    %69 = vmatpush.msra.mxu0 0.0
    %70 = vmatpush.msra.mxu0 0.0
    %71 = vmatpush.msra.mxu0 0.0
    %72 = vmatpush.msra.mxu0 0.0
    %73 = vmatpush.msra.mxu0 %v52
    %74 = vmatpush.msra.mxu0 %v51
    %75 = vmatpush.msra.mxu0 %v50
    %76 = vmatpush.msra.mxu0 %v49
    %77 = vmatmul.f32.gmra.mxu0 %v59
    %v78 = vpop.f32.mrf.mxu0
    %v79 = vadd.f32 %v55, %v78
    %80 = vdwg.mxu0
    %v81 = vmul.f32 %v79, 0.5
    %v82 = vmul.f32 %v79, 0.70710677
    %v83 = vmul.f32 %v82, %v82
    %v84 = vmin.f32 16.0, %v83
    %v85 = vmul.f32 %v84, 2.1237322e-06
    %v86 = vadd.f32 %v85, 0.00028619796
    %v87 = vmul.f32 %v84, %v86
    %v88 = vadd.f32 %v87, 0.0036580483
    %v89 = vmul.f32 %v84, %v88
    %v90 = vadd.f32 %v89, 0.05243302
    %v91 = vmul.f32 %v84, %v90
    %v92 = vadd.f32 %v91, 0.18741608
    %v93 = vmul.f32 %v84, %v92
    %v94 = vadd.f32 %v93, 1.1283791
    %v95 = vmul.f32 %v82, %v94
    %v96 = vmul.f32 %v84, 3.8918573e-05
    %v97 = vadd.f32 %v96, 0.001143296
    %v98 = vmul.f32 %v84, %v97
    %v99 = vadd.f32 %v98, 0.014752088
    %v100 = vmul.f32 %v84, %v99
    %v101 = vadd.f32 %v100, 0.112945676
    %v102 = vmul.f32 %v84, %v101
    %v103 = vadd.f32 %v102, 0.4994258
    %v104 = vmul.f32 %v84, %v103
    %v105 = vadd.f32 %v104, 1.0
    %v106 = vrcp.pop %v105
    %v107 = vmul.f32 %v105, %v106
    %v108 = vsub.f32 1.0, %v107
    %v109 = vmul.f32 %v106, %v108
    %v110 = vadd.f32 %v106, %v109
    %vm111 = vweird.f32 %v105
    %vm112 = vweird.f32 %v106
    %vm113 = vmor %vm111, %vm112
    %v114 = vsel %vm113, %v106, %v110
    %v115 = vand.u32 2147483647, %v105
    %vm116 = vcmp.eq.f32.partialorder %v115, 8.507059e+37
    %v117 = vand.u32 %v105, 2147483648
    %v118 = vor.u32 1.1754944e-38, %v117
    %v119 = vsel %vm116, %v118, %v114
    %v120 = vmul.f32 %v95, %v119
    %v121 = vmin.f32 %v120, 1.0
    %v122 = vmax.f32 %v121, -1.0
    %v123 = vadd.f32 %v122, 1.0
    %v124 = vmul.f32 %v81, %v123
    %v125 = vld [vmem:[#allocation2] sm:$0xff]
    %v126 = vld [vmem:[#allocation2 + $0x8] sm:$0xff]
    %v127 = vld [vmem:[#allocation2 + $0x10] sm:$0xff]
    %v128 = vld [vmem:[#allocation2 + $0x18] sm:$0xff]
    %v129 = vld [vmem:[%s4] sm:$0x1]
    %v131 = vperm.slane %v129, 0
    %v134 = vsel %vm57, %v124, 0
    %136 = vmatpush.msra.mxu0 0.0
    %137 = vmatpush.msra.mxu0 0.0
    %138 = vmatpush.msra.mxu0 0.0
    %139 = vmatpush.msra.mxu0 0.0
    %140 = vmatpush.msra.mxu0 0.0
    %141 = vmatpush.msra.mxu0 0.0
    %142 = vmatpush.msra.mxu0 0.0
    %143 = vmatpush.msra.mxu0 0.0
    %144 = vmatpush.msra.mxu0 0.0
    %145 = vmatpush.msra.mxu0 0.0
    %146 = vmatpush.msra.mxu0 0.0
    %147 = vmatpush.msra.mxu0 0.0
    %148 = vmatpush.msra.mxu0 %v128
    %149 = vmatpush.msra.mxu0 %v127
    %150 = vmatpush.msra.mxu0 %v126
    %151 = vmatpush.msra.mxu0 %v125
    %152 = vmatmul.f32.gmra.mxu0 %v134
    %v153 = vpop.f32.mrf.mxu0
    %v154 = vadd.f32 %v131, %v153
    %155 = vdwg.mxu0
    %v156 = vmul.f32 %v154, 0.5
    %v157 = vmul.f32 %v154, 0.70710677
    %v158 = vmul.f32 %v157, %v157
    %v159 = vmin.f32 16.0, %v158
    %v160 = vmul.f32 %v159, 2.1237322e-06
    %v161 = vadd.f32 %v160, 0.00028619796
    %v162 = vmul.f32 %v159, %v161
    %v163 = vadd.f32 %v162, 0.0036580483
    %v164 = vmul.f32 %v159, %v163
    %v165 = vadd.f32 %v164, 0.05243302
    %v166 = vmul.f32 %v159, %v165
    %v167 = vadd.f32 %v166, 0.18741608
    %v168 = vmul.f32 %v159, %v167
    %v169 = vadd.f32 %v168, 1.1283791
    %v170 = vmul.f32 %v157, %v169
    %v171 = vmul.f32 %v159, 3.8918573e-05
    %v172 = vadd.f32 %v171, 0.001143296
    %v173 = vmul.f32 %v159, %v172
    %v174 = vadd.f32 %v173, 0.014752088
    %v175 = vmul.f32 %v159, %v174
    %v176 = vadd.f32 %v175, 0.112945676
    %v177 = vmul.f32 %v159, %v176
    %v178 = vadd.f32 %v177, 0.4994258
    %v179 = vmul.f32 %v159, %v178
    %v180 = vadd.f32 %v179, 1.0
    %v181 = vrcp.pop %v180
    %v182 = vmul.f32 %v180, %v181
    %v183 = vsub.f32 1.0, %v182
    %v184 = vmul.f32 %v181, %v183
    %v185 = vadd.f32 %v181, %v184
    %vm186 = vweird.f32 %v180
    %vm187 = vweird.f32 %v181
    %vm188 = vmor %vm186, %vm187
    %v189 = vsel %vm188, %v181, %v185
    %v190 = vand.u32 2147483647, %v180
    %vm191 = vcmp.eq.f32.partialorder %v190, 8.507059e+37
    %v192 = vand.u32 %v180, 2147483648
    %v193 = vor.u32 1.1754944e-38, %v192
    %v194 = vsel %vm191, %v193, %v189
    %v195 = vmul.f32 %v170, %v194
    %v196 = vmin.f32 %v195, 1.0
    %v197 = vmax.f32 %v196, -1.0
    %v198 = vadd.f32 %v197, 1.0
    %v199 = vmul.f32 %v156, %v198
    %v200 = vld [vmem:[%s5] sm:$0xff]
    %v201 = vld [vmem:[%s5 + $0x8] sm:$0xff]
    %v202 = vld [vmem:[%s5 + $0x10] sm:$0xff]
    %v203 = vld [vmem:[%s5 + $0x18] sm:$0xff]
    %v204 = vld [vmem:[%s6] sm:$0x1]
    %v206 = vperm.slane %v204, 0
    %v209 = vsel %vm57, %v199, 0
    %211 = vmatpush.msra.mxu0 0.0
    %212 = vmatpush.msra.mxu0 0.0
    %213 = vmatpush.msra.mxu0 0.0
    %214 = vmatpush.msra.mxu0 0.0
    %215 = vmatpush.msra.mxu0 0.0
    %216 = vmatpush.msra.mxu0 0.0
    %217 = vmatpush.msra.mxu0 0.0
    %218 = vmatpush.msra.mxu0 0.0
    %219 = vmatpush.msra.mxu0 0.0
    %220 = vmatpush.msra.mxu0 0.0
    %221 = vmatpush.msra.mxu0 0.0
    %222 = vmatpush.msra.mxu0 0.0
    %223 = vmatpush.msra.mxu0 %v203
    %224 = vmatpush.msra.mxu0 %v202
    %225 = vmatpush.msra.mxu0 %v201
    %226 = vmatpush.msra.mxu0 %v200
    %227 = vmatmul.f32.gmra.mxu0 %v209
    %v228 = vpop.f32.mrf.mxu0
    %v229 = vadd.f32 %v206, %v228
    %230 = vdwg.mxu0
    %v231 = vmul.f32 %v229, 0.5
    %v232 = vmul.f32 %v229, 0.70710677
    %v233 = vmul.f32 %v232, %v232
    %v234 = vmin.f32 16.0, %v233
    %v235 = vmul.f32 %v234, 2.1237322e-06
    %v236 = vadd.f32 %v235, 0.00028619796
    %v237 = vmul.f32 %v234, %v236
    %v238 = vadd.f32 %v237, 0.0036580483
    %v239 = vmul.f32 %v234, %v238
    %v240 = vadd.f32 %v239, 0.05243302
    %v241 = vmul.f32 %v234, %v240
    %v242 = vadd.f32 %v241, 0.18741608
    %v243 = vmul.f32 %v234, %v242
    %v244 = vadd.f32 %v243, 1.1283791
    %v245 = vmul.f32 %v232, %v244
    %v246 = vmul.f32 %v234, 3.8918573e-05
    %v247 = vadd.f32 %v246, 0.001143296
    %v248 = vmul.f32 %v234, %v247
    %v249 = vadd.f32 %v248, 0.014752088
    %v250 = vmul.f32 %v234, %v249
    %v251 = vadd.f32 %v250, 0.112945676
    %v252 = vmul.f32 %v234, %v251
    %v253 = vadd.f32 %v252, 0.4994258
    %v254 = vmul.f32 %v234, %v253
    %v255 = vadd.f32 %v254, 1.0
    %v256 = vrcp.pop %v255
    %v257 = vmul.f32 %v255, %v256
    %v258 = vsub.f32 1.0, %v257
    %v259 = vmul.f32 %v256, %v258
    %v260 = vadd.f32 %v256, %v259
    %vm261 = vweird.f32 %v255
    %vm262 = vweird.f32 %v256
    %vm263 = vmor %vm261, %vm262
    %v264 = vsel %vm263, %v256, %v260
    %v265 = vand.u32 2147483647, %v255
    %vm266 = vcmp.eq.f32.partialorder %v265, 8.507059e+37
    %v267 = vand.u32 %v255, 2147483648
    %v268 = vor.u32 1.1754944e-38, %v267
    %v269 = vsel %vm266, %v268, %v264
    %v270 = vmul.f32 %v245, %v269
    %v271 = vmin.f32 %v270, 1.0
    %v272 = vmax.f32 %v271, -1.0
    %v273 = vadd.f32 %v272, 1.0
    %v274 = vmul.f32 %v231, %v273
    %v275 = vld [vmem:[%s7] sm:$0xff]
    %v276 = vld [vmem:[%s8] sm:$0x1]
    %v278 = vperm.slane %v276, 0
    %vm280 = vcmask 64512
    %v282 = vsel %vm280, %v274, 0
    %284 = vmatpush.msra.mxu0 0.0
    %285 = vmatpush.msra.mxu0 0.0
    %286 = vmatpush.msra.mxu0 0.0
    %287 = vmatpush.msra.mxu0 0.0
    %288 = vmatpush.msra.mxu0 0.0
    %289 = vmatpush.msra.mxu0 0.0
    %290 = vmatpush.msra.mxu0 0.0
    %291 = vmatpush.msra.mxu0 0.0
    %292 = vmatpush.msra.mxu0 0.0
    %293 = vmatpush.msra.mxu0 0.0
    %294 = vmatpush.msra.mxu0 0.0
    %295 = vmatpush.msra.mxu0 0.0
    %296 = vmatpush.msra.mxu0 0.0
    %297 = vmatpush.msra.mxu0 0.0
    %298 = vmatpush.msra.mxu0 0.0
    %299 = vmatpush.msra.mxu0 %v275
    %300 = vmatmul.f32.gmra.mxu0 %v282
    %v301 = vpop.f32.mrf.mxu0
    %v302 = vadd.f32 %v278, %v301
    %303 = vdwg.mxu0
    %vm304 = vcmask 31744
    %305 = vst.msk [vmem:[%s9] sm:$0xff] %vm304, %v302
    // Predicated region
    $region42: #{tpu_custom_call.1} parent=1 // pred_check
      _
    $region43: #{tpu_custom_call.1} parent=1 // pred_check_branch
      %307 = sbr.rel (0) target = $region45
    $region44: #{tpu_custom_call.1} parent=1 // pred_region
      _
    $region45: #{tpu_custom_call.1} parent=1 // pred_fallthru
      _
    // Predicated region
    $region46: #{tpu_custom_call.1} parent=1 // pred_check
      _
    $region47: #{tpu_custom_call.1} parent=1 // pred_check_branch
      %309 = sbr.rel (0) target = $region49
    $region48: #{tpu_custom_call.1} parent=1 // pred_region
      _
    $region49: #{tpu_custom_call.1} parent=1 // pred_fallthru
      _
    %310 = vsyncpa [#allocation3], 1

</llo_original>
